<compile_context>
chip_gen: v7x
topology: tpu7x:2x2x1
jax: 0.10.0
libtpu: 0.0.40
codegen_flags: <defaults>
</compile_context>

<pallas_src>
import functools

import jax
import jax.numpy as jnp
from jax.experimental import pallas as pl
from jax.experimental.pallas import tpu as pltpu


def _round_up(n, m):
    return ((n + m - 1) // m) * m


def rroi_kernel(x_ref, w_ref, b_ref, o_ref):
    # x_ref: (tb, C, HW)  native-layout feature-map tile
    # w_ref: (C, Op)      weight.T / HW, lane-padded on the output dim
    # b_ref: (1, Op)      lane-padded bias
    # o_ref: (tb, Op)
    x = x_ref[...].astype(jnp.float32)
    # Global average pool: cross-lane sum over H*W (1/HW folded into w_ref).
    pooled = jnp.sum(x, axis=-1)                       # (tb, C)
    # Linear layer on the MXU; bias broadcasts over the batch tile.
    out = jnp.dot(pooled, w_ref[...], preferred_element_type=jnp.float32)
    o_ref[...] = (out + b_ref[...]).astype(o_ref.dtype)


@functools.partial(jax.jit, static_argnums=(3, 4))
def rroi_learner_forward(x, weight, bias, num_rois, output_dim):
    """x: (B, C, H, W); weight: (O, C) (PyTorch layout); bias: (O,)."""
    B, C, H, W = x.shape
    O = num_rois * output_dim
    HW = H * W

    # Free, contiguous reshape -- no HBM relayout of the feature map.
    x_flat = x.reshape(B, C, HW)

    # Lane-pad the output features; fold the 1/HW pooling scale into weight.
    Op = _round_up(O, 128)
    w_t = jnp.pad(weight.T.astype(jnp.float32) / HW, ((0, 0), (0, Op - O)))   # (C, Op)
    b2d = jnp.pad(bias.astype(jnp.float32), (0, Op - O)).reshape(1, Op)       # (1, Op)

    # --- VMEM-aware batch tile (counts ALL resident buffers) ---
    itemsize = x_flat.dtype.itemsize
    x_row_bytes = C * HW * itemsize
    out_row_bytes = Op * itemsize
    w_bytes = C * Op * 4                 # Buffered(1): single resident copy
    b_bytes = Op * 4
    budget = 24 * 1024 * 1024            # conservative across v5e/v6e/v7x
    avail = max(budget - w_bytes - b_bytes, 2 * (x_row_bytes + out_row_bytes))
    tb = int(avail // (2 * (x_row_bytes + out_row_bytes)))
    tb = max(1, min(B, 512, tb))
    # v7x megacore: ensure at least 2 grid steps when the batch is big enough.
    if B >= 16:
        half = max(8, (pl.cdiv(B, 2) // 8) * 8)
        tb = min(tb, half)
    if tb < B:
        # Output block (tb, Op): second-to-last dim needs 8-alignment unless
        # it is the full batch extent.
        tb = min(max(8, (tb // 8) * 8), B)
    grid = (pl.cdiv(B, tb),)

    # Actual VMEM usage (double-buffered x/out, single weight/bias) + slack.
    vmem_usage = 2 * tb * (x_row_bytes + out_row_bytes) + w_bytes + b_bytes
    vmem_limit = int(min(48 * 1024 * 1024,
                         max(vmem_usage + (4 << 20), 16 << 20)))

    cost = pl.CostEstimate(
        flops=2 * B * C * O,
        transcendentals=0,
        bytes_accessed=B * C * HW * itemsize + C * Op * 4 + B * Op * itemsize,
    )

    out = pl.pallas_call(
        rroi_kernel,
        out_shape=jax.ShapeDtypeStruct((B, Op), x.dtype),
        grid=grid,
        in_specs=[
            pl.BlockSpec((tb, C, HW), lambda i: (i, 0, 0)),
            pl.BlockSpec((C, Op), lambda i: (0, 0),
                         pipeline_mode=pl.Buffered(1)),
            pl.BlockSpec((1, Op), lambda i: (0, 0),
                         pipeline_mode=pl.Buffered(1)),
        ],
        out_specs=pl.BlockSpec((tb, Op), lambda i: (i, 0)),
        compiler_params=pltpu.CompilerParams(
            dimension_semantics=("parallel",),
            vmem_limit_bytes=vmem_limit,
        ),
        cost_estimate=cost,
    )(x_flat, w_t, b2d)

    return out[:, :O].reshape(B, num_rois, output_dim)


if __name__ == "__main__":
    # Small shapes consistent with the module (input_dim -> C, fc out = num_rois*output_dim).
    B, C, H, W = 2, 256, 8, 8
    num_rois, output_dim = 8, 4
    O = num_rois * output_dim

    key = jax.random.PRNGKey(0)
    kx, kw, kb = jax.random.split(key, 3)

    x = jax.random.normal(kx, (B, C, H, W), dtype=jnp.float32)
    # PyTorch Linear weight layout: (out_features, in_features).
    weight = jax.random.normal(kw, (O, C), dtype=jnp.float32) * 0.02
    bias = jax.random.normal(kb, (O,), dtype=jnp.float32) * 0.01

    y = rroi_learner_forward(x, weight, bias, num_rois, output_dim)
    y = jax.block_until_ready(y)

    # Reference check in plain JAX.
    pooled_ref = jnp.mean(x, axis=(2, 3))
    y_ref = (pooled_ref @ weight.T + bias).reshape(B, num_rois, output_dim)
    assert y.shape == (B, num_rois, output_dim)
    assert jnp.allclose(y, y_ref, atol=1e-4, rtol=1e-4)

    print("KERNEL_OK")
</pallas_src>

<mosaic_0001>
module attributes {stable_mosaic.version = 11 : i64} {
  func.func @rroi_kernel(%arg0: i32, %arg1: memref<2x256x64xf32, #tpu.memory_space<vmem>>, %arg2: memref<256x128xf32, #tpu.memory_space<vmem>>, %arg3: memref<1x128xf32, #tpu.memory_space<vmem>>, %arg4: memref<2x128xf32, #tpu.memory_space<vmem>>) attributes {dimension_semantics = [#tpu.dimension_semantics<parallel>], iteration_bounds = array<i64: 1>, scalar_prefetch = 0 : i64, scratch_operands = 0 : i64, tpu.core_type = #tpu.core_type<tc>, window_params = [{transform_indices = @transform_0, window_bounds = array<i64: 2, 256, 64>}, {pipeline_mode = #tpu.pipeline_mode<synchronous>, transform_indices = @transform_1, window_bounds = array<i64: 256, 128>}, {pipeline_mode = #tpu.pipeline_mode<synchronous>, transform_indices = @transform_2, window_bounds = array<i64: 1, 128>}, {transform_indices = @transform_3, window_bounds = array<i64: 2, 128>}]} {
    %c0 = arith.constant 0 : index
    %c0_0 = arith.constant 0 : index
    %c0_1 = arith.constant 0 : index
    %0 = vector.load %arg1[%c0, %c0_0, %c0_1] : memref<2x256x64xf32, #tpu.memory_space<vmem>>, vector<2x256x64xf32>
    %cst = arith.constant dense<0.000000e+00> : vector<2x256xf32>
    %1 = vector.multi_reduction <add>, %0, %cst [2] : vector<2x256x64xf32> to vector<2x256xf32>
    %c0_2 = arith.constant 0 : index
    %c0_3 = arith.constant 0 : index
    %2 = vector.load %arg2[%c0_2, %c0_3] : memref<256x128xf32, #tpu.memory_space<vmem>>, vector<256x128xf32>
    %cst_4 = arith.constant dense<0.000000e+00> : vector<2x128xf32>
    %3 = tpu.matmul %1, %2, %cst_4 {dimension_numbers = #tpu.dot_dimension_numbers<[1], [0], [0], [1], [0, 0, 1, 1], [], []>} : vector<2x256xf32>, vector<256x128xf32>, vector<2x128xf32> -> vector<2x128xf32>
    %c0_5 = arith.constant 0 : index
    %c0_6 = arith.constant 0 : index
    %4 = vector.load %arg3[%c0_5, %c0_6] : memref<1x128xf32, #tpu.memory_space<vmem>>, vector<1x128xf32>
    %5 = vector.broadcast %4 : vector<1x128xf32> to vector<2x128xf32>
    %6 = arith.addf %3, %5 : vector<2x128xf32>
    %c0_7 = arith.constant 0 : index
    %c0_8 = arith.constant 0 : index
    %7 = vector.load %arg4[%c0_7, %c0_8] : memref<2x128xf32, #tpu.memory_space<vmem>>, vector<2x128xf32>
    tpu.vector_store %arg4[%c0_7, %c0_8], %6 {strides = array<i32>} : memref<2x128xf32, #tpu.memory_space<vmem>>, vector<2x128xf32>,
    return
  }
  func.func @transform_0(%arg0: i32) -> (i32, i32, i32) {
    %c0_i32 = arith.constant 0 : i32
    %c0_i32_0 = arith.constant 0 : i32
    %c0_i32_1 = arith.constant 0 : i32
    return %arg0, %c0_i32, %c0_i32_0 : i32, i32, i32
  }
  func.func @transform_1(%arg0: i32) -> (i32, i32) {
    %c0_i32 = arith.constant 0 : i32
    %c0_i32_0 = arith.constant 0 : i32
    %c0_i32_1 = arith.constant 0 : i32
    return %c0_i32, %c0_i32_0 : i32, i32
  }
  func.func @transform_2(%arg0: i32) -> (i32, i32) {
    %c0_i32 = arith.constant 0 : i32
    %c0_i32_0 = arith.constant 0 : i32
    %c0_i32_1 = arith.constant 0 : i32
    return %c0_i32, %c0_i32_0 : i32, i32
  }
  func.func @transform_3(%arg0: i32) -> (i32, i32) {
    %c0_i32 = arith.constant 0 : i32
    %c0_i32_0 = arith.constant 0 : i32
    return %arg0, %c0_i32 : i32, i32
  }
}

</mosaic_0001>

<llo_original>
// kernel: rroi_learner_forward.1
$region0: #{rroi_learner_forward.1}
  #allocation0 [shape = 'u32[]', space=smem, size = 0x4, offset = 0x4, fixed_abs, tag = 'smem constant byte address 0x4 - core index']
  #allocation1 [shape = 'u32[144,128]{1,0:T(1,128)}', space=vmem, size = 0x12000, scoped, tag = 'internal scratch']
  %s0 = inlined_call_operand.vmem [shape: f32[2,256,64], index: 0, kind: input, shape index: {}]
  %s1 = inlined_call_operand.vmem [shape: f32[256,128], index: 1, kind: input, shape index: {}]
  %s2 = inlined_call_operand.vmem [shape: f32[1,128], index: 2, kind: input, shape index: {}]
  %s3 = inlined_call_operand.vmem [shape: f32[2,128], index: 3, kind: output, shape index: {}]
  %s4 = sld [smem:[#allocation0]]
  $region22: #{rroi_learner_forward.1} parent=0
    _
  %s6 = ssub.s32 1, %s4
  %s7 = scalar_select 0, %s6, %s4
  // Predicated region
  $region2: #{rroi_learner_forward.1} parent=0 // pred_check
    _
  $region3: #{rroi_learner_forward.1} parent=0 // pred_check_branch
    %9 = sbr.rel (0) target = $region5
  $region4: #{rroi_learner_forward.1} parent=0 // pred_region
    _
  $region5: #{rroi_learner_forward.1} parent=0 // pred_fallthru
    _
  // Predicated region
  $region6: #{rroi_learner_forward.1} parent=0 // pred_check
    _
  $region7: #{rroi_learner_forward.1} parent=0 // pred_check_branch
    %11 = sbr.rel (0) target = $region9
  $region8: #{rroi_learner_forward.1} parent=0 // pred_region
    _
  $region9: #{rroi_learner_forward.1} parent=0 // pred_fallthru
    _
  // Predicated region
  $region10: #{rroi_learner_forward.1} parent=0 // pred_check
    _
  $region11: #{rroi_learner_forward.1} parent=0 // pred_check_branch
    %13 = sbr.rel (0) target = $region13
  $region12: #{rroi_learner_forward.1} parent=0 // pred_region
    _
  $region13: #{rroi_learner_forward.1} parent=0 // pred_fallthru
    _
  %v14 = vld [vmem:[%s0] sm:$0xff]
  %v15 = vld [vmem:[%s0 + $0x8] sm:$0xff]
  %v16 = vld [vmem:[%s0 + $0x10] sm:$0xff]
  %v17 = vld [vmem:[%s0 + $0x18] sm:$0xff]
  %v18 = vld [vmem:[%s0 + $0x20] sm:$0xff]
  %v19 = vld [vmem:[%s0 + $0x28] sm:$0xff]
  %v20 = vld [vmem:[%s0 + $0x30] sm:$0xff]
  %v21 = vld [vmem:[%s0 + $0x38] sm:$0xff]
  %v22 = vld [vmem:[%s0 + $0x40] sm:$0xff]
  %v23 = vld [vmem:[%s0 + $0x48] sm:$0xff]
  %v24 = vld [vmem:[%s0 + $0x50] sm:$0xff]
  %v25 = vld [vmem:[%s0 + $0x58] sm:$0xff]
  %v26 = vld [vmem:[%s0 + $0x60] sm:$0xff]
  %v27 = vld [vmem:[%s0 + $0x68] sm:$0xff]
  %v28 = vld [vmem:[%s0 + $0x70] sm:$0xff]
  %v29 = vld [vmem:[%s0 + $0x78] sm:$0xff]
  %v30 = vld [vmem:[%s0 + $0x80] sm:$0xff]
  %v31 = vld [vmem:[%s0 + $0x88] sm:$0xff]
  %v32 = vld [vmem:[%s0 + $0x90] sm:$0xff]
  %v33 = vld [vmem:[%s0 + $0x98] sm:$0xff]
  %v34 = vld [vmem:[%s0 + $0xa0] sm:$0xff]
  %v35 = vld [vmem:[%s0 + $0xa8] sm:$0xff]
  %v36 = vld [vmem:[%s0 + $0xb0] sm:$0xff]
  %v37 = vld [vmem:[%s0 + $0xb8] sm:$0xff]
  %v38 = vld [vmem:[%s0 + $0xc0] sm:$0xff]
  %v39 = vld [vmem:[%s0 + $0xc8] sm:$0xff]
  %v40 = vld [vmem:[%s0 + $0xd0] sm:$0xff]
  %v41 = vld [vmem:[%s0 + $0xd8] sm:$0xff]
  %v42 = vld [vmem:[%s0 + $0xe0] sm:$0xff]
  %v43 = vld [vmem:[%s0 + $0xe8] sm:$0xff]
  %v44 = vld [vmem:[%s0 + $0xf0] sm:$0xff]
  %v45 = vld [vmem:[%s0 + $0xf8] sm:$0xff]
  %v46 = vld [vmem:[%s0 + $0x100] sm:$0xff]
  %v47 = vld [vmem:[%s0 + $0x108] sm:$0xff]
  %v48 = vld [vmem:[%s0 + $0x110] sm:$0xff]
  %v49 = vld [vmem:[%s0 + $0x118] sm:$0xff]
  %v50 = vld [vmem:[%s0 + $0x120] sm:$0xff]
  %v51 = vld [vmem:[%s0 + $0x128] sm:$0xff]
  %v52 = vld [vmem:[%s0 + $0x130] sm:$0xff]
  %v53 = vld [vmem:[%s0 + $0x138] sm:$0xff]
  %v54 = vld [vmem:[%s0 + $0x140] sm:$0xff]
  %v55 = vld [vmem:[%s0 + $0x148] sm:$0xff]
  %v56 = vld [vmem:[%s0 + $0x150] sm:$0xff]
  %v57 = vld [vmem:[%s0 + $0x158] sm:$0xff]
  %v58 = vld [vmem:[%s0 + $0x160] sm:$0xff]
  %v59 = vld [vmem:[%s0 + $0x168] sm:$0xff]
  %v60 = vld [vmem:[%s0 + $0x170] sm:$0xff]
  %v61 = vld [vmem:[%s0 + $0x178] sm:$0xff]
  %v62 = vld [vmem:[%s0 + $0x180] sm:$0xff]
  %v63 = vld [vmem:[%s0 + $0x188] sm:$0xff]
  %v64 = vld [vmem:[%s0 + $0x190] sm:$0xff]
  %v65 = vld [vmem:[%s0 + $0x198] sm:$0xff]
  %v66 = vld [vmem:[%s0 + $0x1a0] sm:$0xff]
  %v67 = vld [vmem:[%s0 + $0x1a8] sm:$0xff]
  %v68 = vld [vmem:[%s0 + $0x1b0] sm:$0xff]
  %v69 = vld [vmem:[%s0 + $0x1b8] sm:$0xff]
  %v70 = vld [vmem:[%s0 + $0x1c0] sm:$0xff]
  %v71 = vld [vmem:[%s0 + $0x1c8] sm:$0xff]
  %v72 = vld [vmem:[%s0 + $0x1d0] sm:$0xff]
  %v73 = vld [vmem:[%s0 + $0x1d8] sm:$0xff]
  %v74 = vld [vmem:[%s0 + $0x1e0] sm:$0xff]
  %v75 = vld [vmem:[%s0 + $0x1e8] sm:$0xff]
  %v76 = vld [vmem:[%s0 + $0x1f0] sm:$0xff]
  %v77 = vld [vmem:[%s0 + $0x1f8] sm:$0xff]
  %vm78 = vcmask 523264
  %v79 = vsel %vm78, %v14, 0.0
  %80 = vadd.xlane.f32.xlu0 %v79
  %v81 = vpop.xlane.xlu0 %80
  %v82 = vsel %vm78, %v15, 0.0
  %83 = vadd.xlane.f32.xlu0 %v82
  %v84 = vpop.xlane.xlu0 %83
  %v85 = vsel %vm78, %v16, 0.0
  %86 = vadd.xlane.f32.xlu0 %v85
  %v87 = vpop.xlane.xlu0 %86
  %v88 = vsel %vm78, %v17, 0.0
  %89 = vadd.xlane.f32.xlu0 %v88
  %v90 = vpop.xlane.xlu0 %89
  %v91 = vsel %vm78, %v18, 0.0
  %92 = vadd.xlane.f32.xlu0 %v91
  %v93 = vpop.xlane.xlu0 %92
  %v94 = vsel %vm78, %v19, 0.0
  %95 = vadd.xlane.f32.xlu0 %v94
  %v96 = vpop.xlane.xlu0 %95
  %v97 = vsel %vm78, %v20, 0.0
  %98 = vadd.xlane.f32.xlu0 %v97
  %v99 = vpop.xlane.xlu0 %98
  %v100 = vsel %vm78, %v21, 0.0
  %101 = vadd.xlane.f32.xlu0 %v100
  %v102 = vpop.xlane.xlu0 %101
  %v103 = vsel %vm78, %v22, 0.0
  %104 = vadd.xlane.f32.xlu0 %v103
  %v105 = vpop.xlane.xlu0 %104
  %v106 = vsel %vm78, %v23, 0.0
  %107 = vadd.xlane.f32.xlu0 %v106
  %v108 = vpop.xlane.xlu0 %107
  %v109 = vsel %vm78, %v24, 0.0
  %110 = vadd.xlane.f32.xlu0 %v109
  %v111 = vpop.xlane.xlu0 %110
  %v112 = vsel %vm78, %v25, 0.0
  %113 = vadd.xlane.f32.xlu0 %v112
  %v114 = vpop.xlane.xlu0 %113
  %v115 = vsel %vm78, %v26, 0.0
  %116 = vadd.xlane.f32.xlu0 %v115
  %v117 = vpop.xlane.xlu0 %116
  %v118 = vsel %vm78, %v27, 0.0
  %119 = vadd.xlane.f32.xlu0 %v118
  %v120 = vpop.xlane.xlu0 %119
  %v121 = vsel %vm78, %v28, 0.0
  %122 = vadd.xlane.f32.xlu0 %v121
  %v123 = vpop.xlane.xlu0 %122
  %v124 = vsel %vm78, %v29, 0.0
  %125 = vadd.xlane.f32.xlu0 %v124
  %v126 = vpop.xlane.xlu0 %125
  %v127 = vsel %vm78, %v30, 0.0
  %128 = vadd.xlane.f32.xlu0 %v127
  %v129 = vpop.xlane.xlu0 %128
  %v130 = vsel %vm78, %v31, 0.0
  %131 = vadd.xlane.f32.xlu0 %v130
  %v132 = vpop.xlane.xlu0 %131
  %v133 = vsel %vm78, %v32, 0.0
  %134 = vadd.xlane.f32.xlu0 %v133
  %v135 = vpop.xlane.xlu0 %134
  %v136 = vsel %vm78, %v33, 0.0
  %137 = vadd.xlane.f32.xlu0 %v136
  %v138 = vpop.xlane.xlu0 %137
  %v139 = vsel %vm78, %v34, 0.0
  %140 = vadd.xlane.f32.xlu0 %v139
  %v141 = vpop.xlane.xlu0 %140
  %v142 = vsel %vm78, %v35, 0.0
  %143 = vadd.xlane.f32.xlu0 %v142
  %v144 = vpop.xlane.xlu0 %143
  %v145 = vsel %vm78, %v36, 0.0
  %146 = vadd.xlane.f32.xlu0 %v145
  %v147 = vpop.xlane.xlu0 %146
  %v148 = vsel %vm78, %v37, 0.0
  %149 = vadd.xlane.f32.xlu0 %v148
  %v150 = vpop.xlane.xlu0 %149
  %v151 = vsel %vm78, %v38, 0.0
  %152 = vadd.xlane.f32.xlu0 %v151
  %v153 = vpop.xlane.xlu0 %152
  %v154 = vsel %vm78, %v39, 0.0
  %155 = vadd.xlane.f32.xlu0 %v154
  %v156 = vpop.xlane.xlu0 %155
  %v157 = vsel %vm78, %v40, 0.0
  %158 = vadd.xlane.f32.xlu0 %v157
  %v159 = vpop.xlane.xlu0 %158
  %v160 = vsel %vm78, %v41, 0.0
  %161 = vadd.xlane.f32.xlu0 %v160
  %v162 = vpop.xlane.xlu0 %161
  %v163 = vsel %vm78, %v42, 0.0
  %164 = vadd.xlane.f32.xlu0 %v163
  %v165 = vpop.xlane.xlu0 %164
  %v166 = vsel %vm78, %v43, 0.0
  %167 = vadd.xlane.f32.xlu0 %v166
  %v168 = vpop.xlane.xlu0 %167
  %v169 = vsel %vm78, %v44, 0.0
  %170 = vadd.xlane.f32.xlu0 %v169
  %v171 = vpop.xlane.xlu0 %170
  %v172 = vsel %vm78, %v45, 0.0
  %173 = vadd.xlane.f32.xlu0 %v172
  %v174 = vpop.xlane.xlu0 %173
  %v175 = vsel %vm78, %v46, 0.0
  %176 = vadd.xlane.f32.xlu0 %v175
  %v177 = vpop.xlane.xlu0 %176
  %v178 = vsel %vm78, %v47, 0.0
  %179 = vadd.xlane.f32.xlu0 %v178
  %v180 = vpop.xlane.xlu0 %179
  %v181 = vsel %vm78, %v48, 0.0
  %182 = vadd.xlane.f32.xlu0 %v181
  %v183 = vpop.xlane.xlu0 %182
  %v184 = vsel %vm78, %v49, 0.0
  %185 = vadd.xlane.f32.xlu0 %v184
  %v186 = vpop.xlane.xlu0 %185
  %v187 = vsel %vm78, %v50, 0.0
  %188 = vadd.xlane.f32.xlu0 %v187
  %v189 = vpop.xlane.xlu0 %188
  %v190 = vsel %vm78, %v51, 0.0
  %191 = vadd.xlane.f32.xlu0 %v190
  %v192 = vpop.xlane.xlu0 %191
  %v193 = vsel %vm78, %v52, 0.0
  %194 = vadd.xlane.f32.xlu0 %v193
  %v195 = vpop.xlane.xlu0 %194
  %v196 = vsel %vm78, %v53, 0.0
  %197 = vadd.xlane.f32.xlu0 %v196
  %v198 = vpop.xlane.xlu0 %197
  %v199 = vsel %vm78, %v54, 0.0
  %200 = vadd.xlane.f32.xlu0 %v199
  %v201 = vpop.xlane.xlu0 %200
  %v202 = vsel %vm78, %v55, 0.0
  %203 = vadd.xlane.f32.xlu0 %v202
  %v204 = vpop.xlane.xlu0 %203
  %v205 = vsel %vm78, %v56, 0.0
  %206 = vadd.xlane.f32.xlu0 %v205
  %v207 = vpop.xlane.xlu0 %206
  %v208 = vsel %vm78, %v57, 0.0
  %209 = vadd.xlane.f32.xlu0 %v208
  %v210 = vpop.xlane.xlu0 %209
  %v211 = vsel %vm78, %v58, 0.0
  %212 = vadd.xlane.f32.xlu0 %v211
  %v213 = vpop.xlane.xlu0 %212
  %v214 = vsel %vm78, %v59, 0.0
  %215 = vadd.xlane.f32.xlu0 %v214
  %v216 = vpop.xlane.xlu0 %215
  %v217 = vsel %vm78, %v60, 0.0
  %218 = vadd.xlane.f32.xlu0 %v217
  %v219 = vpop.xlane.xlu0 %218
  %v220 = vsel %vm78, %v61, 0.0
  %221 = vadd.xlane.f32.xlu0 %v220
  %v222 = vpop.xlane.xlu0 %221
  %v223 = vsel %vm78, %v62, 0.0
  %224 = vadd.xlane.f32.xlu0 %v223
  %v225 = vpop.xlane.xlu0 %224
  %v226 = vsel %vm78, %v63, 0.0
  %227 = vadd.xlane.f32.xlu0 %v226
  %v228 = vpop.xlane.xlu0 %227
  %v229 = vsel %vm78, %v64, 0.0
  %230 = vadd.xlane.f32.xlu0 %v229
  %v231 = vpop.xlane.xlu0 %230
  %v232 = vsel %vm78, %v65, 0.0
  %233 = vadd.xlane.f32.xlu0 %v232
  %v234 = vpop.xlane.xlu0 %233
  %v235 = vsel %vm78, %v66, 0.0
  %236 = vadd.xlane.f32.xlu0 %v235
  %v237 = vpop.xlane.xlu0 %236
  %v238 = vsel %vm78, %v67, 0.0
  %239 = vadd.xlane.f32.xlu0 %v238
  %v240 = vpop.xlane.xlu0 %239
  %v241 = vsel %vm78, %v68, 0.0
  %242 = vadd.xlane.f32.xlu0 %v241
  %v243 = vpop.xlane.xlu0 %242
  %v244 = vsel %vm78, %v69, 0.0
  %245 = vadd.xlane.f32.xlu0 %v244
  %v246 = vpop.xlane.xlu0 %245
  %v247 = vsel %vm78, %v70, 0.0
  %248 = vadd.xlane.f32.xlu0 %v247
  %v249 = vpop.xlane.xlu0 %248
  %v250 = vsel %vm78, %v71, 0.0
  %251 = vadd.xlane.f32.xlu0 %v250
  %v252 = vpop.xlane.xlu0 %251
  %v253 = vsel %vm78, %v72, 0.0
  %254 = vadd.xlane.f32.xlu0 %v253
  %v255 = vpop.xlane.xlu0 %254
  %v256 = vsel %vm78, %v73, 0.0
  %257 = vadd.xlane.f32.xlu0 %v256
  %v258 = vpop.xlane.xlu0 %257
  %v259 = vsel %vm78, %v74, 0.0
  %260 = vadd.xlane.f32.xlu0 %v259
  %v261 = vpop.xlane.xlu0 %260
  %v262 = vsel %vm78, %v75, 0.0
  %263 = vadd.xlane.f32.xlu0 %v262
  %v264 = vpop.xlane.xlu0 %263
  %v265 = vsel %vm78, %v76, 0.0
  %266 = vadd.xlane.f32.xlu0 %v265
  %v267 = vpop.xlane.xlu0 %266
  %v268 = vsel %vm78, %v77, 0.0
  %269 = vadd.xlane.f32.xlu0 %v268
  %v270 = vpop.xlane.xlu0 %269
  %v271 = vld [vmem:[%s1] sm:$0xff]
  %v272 = vld [vmem:[%s1 + $0x8] sm:$0xff]
  %v273 = vld [vmem:[%s1 + $0x10] sm:$0xff]
  %v274 = vld [vmem:[%s1 + $0x18] sm:$0xff]
  %v275 = vld [vmem:[%s1 + $0x20] sm:$0xff]
  %v276 = vld [vmem:[%s1 + $0x28] sm:$0xff]
  %v277 = vld [vmem:[%s1 + $0x30] sm:$0xff]
  %v278 = vld [vmem:[%s1 + $0x38] sm:$0xff]
  %v279 = vld [vmem:[%s1 + $0x40] sm:$0xff]
  %v280 = vld [vmem:[%s1 + $0x48] sm:$0xff]
  %v281 = vld [vmem:[%s1 + $0x50] sm:$0xff]
  %v282 = vld [vmem:[%s1 + $0x58] sm:$0xff]
  %v283 = vld [vmem:[%s1 + $0x60] sm:$0xff]
  %v284 = vld [vmem:[%s1 + $0x68] sm:$0xff]
  %v285 = vld [vmem:[%s1 + $0x70] sm:$0xff]
  %v286 = vld [vmem:[%s1 + $0x78] sm:$0xff]
  %v287 = vld [vmem:[%s1 + $0x80] sm:$0xff]
  %v288 = vld [vmem:[%s1 + $0x88] sm:$0xff]
  %v289 = vld [vmem:[%s1 + $0x90] sm:$0xff]
  %v290 = vld [vmem:[%s1 + $0x98] sm:$0xff]
  %v291 = vld [vmem:[%s1 + $0xa0] sm:$0xff]
  %v292 = vld [vmem:[%s1 + $0xa8] sm:$0xff]
  %v293 = vld [vmem:[%s1 + $0xb0] sm:$0xff]
  %v294 = vld [vmem:[%s1 + $0xb8] sm:$0xff]
  %v295 = vld [vmem:[%s1 + $0xc0] sm:$0xff]
  %v296 = vld [vmem:[%s1 + $0xc8] sm:$0xff]
  %v297 = vld [vmem:[%s1 + $0xd0] sm:$0xff]
  %v298 = vld [vmem:[%s1 + $0xd8] sm:$0xff]
  %v299 = vld [vmem:[%s1 + $0xe0] sm:$0xff]
  %v300 = vld [vmem:[%s1 + $0xe8] sm:$0xff]
  %v301 = vld [vmem:[%s1 + $0xf0] sm:$0xff]
  %v302 = vld [vmem:[%s1 + $0xf8] sm:$0xff]
  %v303 = vld [vmem:[%s2] sm:$0x1]
  %v305 = vlaneseq
  %v306 = vshrl.u32 %v305, 7
  %v307 = vsub.s32 0, %v306
  %v308 = vrot.slane %v303, %v307
  %v374 = vlaneseq
  %v375 = vand.u32 %v374, 127
  %v376 = vlaneseq
  %v377 = vshrl.u32 %v376, 7
  %v378 = vsub.s32 %v375, %v377
  %v379 = vrot.slane %v81, %v378
  %v380 = vadd.s32 %v375, 4294967288
  %v381 = vlaneseq
  %v382 = vshrl.u32 %v381, 7
  %v383 = vsub.s32 %v380, %v382
  %v384 = vrot.slane %v84, %v383
  %vm385 = vcmask 130112
  %v386 = vsel %vm385, %v384, %v379
  %v387 = vadd.s32 %v375, 4294967280
  %v388 = vlaneseq
  %v389 = vshrl.u32 %v388, 7
  %v390 = vsub.s32 %v387, %v389
  %v391 = vrot.slane %v87, %v390
  %vm392 = vcmask 195712
  %v393 = vsel %vm392, %v391, %v386
  %v394 = vadd.s32 %v375, 4294967272
  %v395 = vlaneseq
  %v396 = vshrl.u32 %v395, 7
  %v397 = vsub.s32 %v394, %v396
  %v398 = vrot.slane %v90, %v397
  %vm399 = vcmask 261312
  %v400 = vsel %vm399, %v398, %v393
  %v401 = vadd.s32 %v375, 4294967264
  %v402 = vlaneseq
  %v403 = vshrl.u32 %v402, 7
  %v404 = vsub.s32 %v401, %v403
  %v405 = vrot.slane %v93, %v404
  %vm406 = vcmask 326912
  %v407 = vsel %vm406, %v405, %v400
  %v408 = vadd.s32 %v375, 4294967256
  %v409 = vlaneseq
  %v410 = vshrl.u32 %v409, 7
  %v411 = vsub.s32 %v408, %v410
  %v412 = vrot.slane %v96, %v411
  %vm413 = vcmask 392512
  %v414 = vsel %vm413, %v412, %v407
  %v415 = vadd.s32 %v375, 4294967248
  %v416 = vlaneseq
  %v417 = vshrl.u32 %v416, 7
  %v418 = vsub.s32 %v415, %v417
  %v419 = vrot.slane %v99, %v418
  %vm420 = vcmask 458112
  %v421 = vsel %vm420, %v419, %v414
  %v422 = vadd.s32 %v375, 4294967240
  %v423 = vlaneseq
  %v424 = vshrl.u32 %v423, 7
  %v425 = vsub.s32 %v422, %v424
  %v426 = vrot.slane %v102, %v425
  %vm427 = vcmask 523712
  %v428 = vsel %vm427, %v426, %v421
  %v429 = vadd.s32 %v375, 4294967232
  %v430 = vlaneseq
  %v431 = vshrl.u32 %v430, 7
  %v432 = vsub.s32 %v429, %v431
  %v433 = vrot.slane %v105, %v432
  %vm434 = vcmask 589312
  %v435 = vsel %vm434, %v433, %v428
  %v436 = vadd.s32 %v375, 4294967224
  %v437 = vlaneseq
  %v438 = vshrl.u32 %v437, 7
  %v439 = vsub.s32 %v436, %v438
  %v440 = vrot.slane %v108, %v439
  %vm441 = vcmask 654912
  %v442 = vsel %vm441, %v440, %v435
  %v443 = vadd.s32 %v375, 4294967216
  %v444 = vlaneseq
  %v445 = vshrl.u32 %v444, 7
  %v446 = vsub.s32 %v443, %v445
  %v447 = vrot.slane %v111, %v446
  %vm448 = vcmask 720512
  %v449 = vsel %vm448, %v447, %v442
  %v450 = vadd.s32 %v375, 4294967208
  %v451 = vlaneseq
  %v452 = vshrl.u32 %v451, 7
  %v453 = vsub.s32 %v450, %v452
  %v454 = vrot.slane %v114, %v453
  %vm455 = vcmask 786112
  %v456 = vsel %vm455, %v454, %v449
  %v457 = vadd.s32 %v375, 4294967200
  %v458 = vlaneseq
  %v459 = vshrl.u32 %v458, 7
  %v460 = vsub.s32 %v457, %v459
  %v461 = vrot.slane %v117, %v460
  %vm462 = vcmask 851712
  %v463 = vsel %vm462, %v461, %v456
  %v464 = vadd.s32 %v375, 4294967192
  %v465 = vlaneseq
  %v466 = vshrl.u32 %v465, 7
  %v467 = vsub.s32 %v464, %v466
  %v468 = vrot.slane %v120, %v467
  %vm469 = vcmask 917312
  %v470 = vsel %vm469, %v468, %v463
  %v471 = vadd.s32 %v375, 4294967184
  %v472 = vlaneseq
  %v473 = vshrl.u32 %v472, 7
  %v474 = vsub.s32 %v471, %v473
  %v475 = vrot.slane %v123, %v474
  %vm476 = vcmask 982912
  %v477 = vsel %vm476, %v475, %v470
  %v478 = vadd.s32 %v375, 4294967176
  %v479 = vlaneseq
  %v480 = vshrl.u32 %v479, 7
  %v481 = vsub.s32 %v478, %v480
  %v482 = vrot.slane %v126, %v481
  %vm483 = vcmask 1048512
  %v484 = vsel %vm483, %v482, %v477
  %v485 = vlaneseq
  %v486 = vshrl.u32 %v485, 7
  %v487 = vsub.s32 %v375, %v486
  %v488 = vrot.slane %v129, %v487
  %v489 = vlaneseq
  %v490 = vshrl.u32 %v489, 7
  %v491 = vsub.s32 %v380, %v490
  %v492 = vrot.slane %v132, %v491
  %v493 = vsel %vm385, %v492, %v488
  %v494 = vlaneseq
  %v495 = vshrl.u32 %v494, 7
  %v496 = vsub.s32 %v387, %v495
  %v497 = vrot.slane %v135, %v496
  %v498 = vsel %vm392, %v497, %v493
  %v499 = vlaneseq
  %v500 = vshrl.u32 %v499, 7
  %v501 = vsub.s32 %v394, %v500
  %v502 = vrot.slane %v138, %v501
  %v503 = vsel %vm399, %v502, %v498
  %v504 = vlaneseq
  %v505 = vshrl.u32 %v504, 7
  %v506 = vsub.s32 %v401, %v505
  %v507 = vrot.slane %v141, %v506
  %v508 = vsel %vm406, %v507, %v503
  %v509 = vlaneseq
  %v510 = vshrl.u32 %v509, 7
  %v511 = vsub.s32 %v408, %v510
  %v512 = vrot.slane %v144, %v511
  %v513 = vsel %vm413, %v512, %v508
  %v514 = vlaneseq
  %v515 = vshrl.u32 %v514, 7
  %v516 = vsub.s32 %v415, %v515
  %v517 = vrot.slane %v147, %v516
  %v518 = vsel %vm420, %v517, %v513
  %v519 = vlaneseq
  %v520 = vshrl.u32 %v519, 7
  %v521 = vsub.s32 %v422, %v520
  %v522 = vrot.slane %v150, %v521
  %v523 = vsel %vm427, %v522, %v518
  %v524 = vlaneseq
  %v525 = vshrl.u32 %v524, 7
  %v526 = vsub.s32 %v429, %v525
  %v527 = vrot.slane %v153, %v526
  %v528 = vsel %vm434, %v527, %v523
  %v529 = vlaneseq
  %v530 = vshrl.u32 %v529, 7
  %v531 = vsub.s32 %v436, %v530
  %v532 = vrot.slane %v156, %v531
  %v533 = vsel %vm441, %v532, %v528
  %v534 = vlaneseq
  %v535 = vshrl.u32 %v534, 7
  %v536 = vsub.s32 %v443, %v535
  %v537 = vrot.slane %v159, %v536
  %v538 = vsel %vm448, %v537, %v533
  %v539 = vlaneseq
  %v540 = vshrl.u32 %v539, 7
  %v541 = vsub.s32 %v450, %v540
  %v542 = vrot.slane %v162, %v541
  %v543 = vsel %vm455, %v542, %v538
  %v544 = vlaneseq
  %v545 = vshrl.u32 %v544, 7
  %v546 = vsub.s32 %v457, %v545
  %v547 = vrot.slane %v165, %v546
  %v548 = vsel %vm462, %v547, %v543
  %v549 = vlaneseq
  %v550 = vshrl.u32 %v549, 7
  %v551 = vsub.s32 %v464, %v550
  %v552 = vrot.slane %v168, %v551
  %v553 = vsel %vm469, %v552, %v548
  %v554 = vlaneseq
  %v555 = vshrl.u32 %v554, 7
  %v556 = vsub.s32 %v471, %v555
  %v557 = vrot.slane %v171, %v556
  %v558 = vsel %vm476, %v557, %v553
  %v559 = vlaneseq
  %v560 = vshrl.u32 %v559, 7
  %v561 = vsub.s32 %v478, %v560
  %v562 = vrot.slane %v174, %v561
  %v563 = vsel %vm483, %v562, %v558
  %v564 = vlaneseq
  %v565 = vshrl.u32 %v564, 7
  %v566 = vsub.s32 %v375, %v565
  %v567 = vrot.slane %v177, %v566
  %v568 = vlaneseq
  %v569 = vshrl.u32 %v568, 7
  %v570 = vsub.s32 %v380, %v569
  %v571 = vrot.slane %v180, %v570
  %v572 = vsel %vm385, %v571, %v567
  %v573 = vlaneseq
  %v574 = vshrl.u32 %v573, 7
  %v575 = vsub.s32 %v387, %v574
  %v576 = vrot.slane %v183, %v575
  %v577 = vsel %vm392, %v576, %v572
  %v578 = vlaneseq
  %v579 = vshrl.u32 %v578, 7
  %v580 = vsub.s32 %v394, %v579
  %v581 = vrot.slane %v186, %v580
  %v582 = vsel %vm399, %v581, %v577
  %v583 = vlaneseq
  %v584 = vshrl.u32 %v583, 7
  %v585 = vsub.s32 %v401, %v584
  %v586 = vrot.slane %v189, %v585
  %v587 = vsel %vm406, %v586, %v582
  %v588 = vlaneseq
  %v589 = vshrl.u32 %v588, 7
  %v590 = vsub.s32 %v408, %v589
  %v591 = vrot.slane %v192, %v590
  %v592 = vsel %vm413, %v591, %v587
  %v593 = vlaneseq
  %v594 = vshrl.u32 %v593, 7
  %v595 = vsub.s32 %v415, %v594
  %v596 = vrot.slane %v195, %v595
  %v597 = vsel %vm420, %v596, %v592
  %v598 = vlaneseq
  %v599 = vshrl.u32 %v598, 7
  %v600 = vsub.s32 %v422, %v599
  %v601 = vrot.slane %v198, %v600
  %v602 = vsel %vm427, %v601, %v597
  %v603 = vlaneseq
  %v604 = vshrl.u32 %v603, 7
  %v605 = vsub.s32 %v429, %v604
  %v606 = vrot.slane %v201, %v605
  %v607 = vsel %vm434, %v606, %v602
  %v608 = vlaneseq
  %v609 = vshrl.u32 %v608, 7
  %v610 = vsub.s32 %v436, %v609
  %v611 = vrot.slane %v204, %v610
  %v612 = vsel %vm441, %v611, %v607
  %v613 = vlaneseq
  %v614 = vshrl.u32 %v613, 7
  %v615 = vsub.s32 %v443, %v614
  %v616 = vrot.slane %v207, %v615
  %v617 = vsel %vm448, %v616, %v612
  %v618 = vlaneseq
  %v619 = vshrl.u32 %v618, 7
  %v620 = vsub.s32 %v450, %v619
  %v621 = vrot.slane %v210, %v620
  %v622 = vsel %vm455, %v621, %v617
  %v623 = vlaneseq
  %v624 = vshrl.u32 %v623, 7
  %v625 = vsub.s32 %v457, %v624
  %v626 = vrot.slane %v213, %v625
  %v627 = vsel %vm462, %v626, %v622
  %v628 = vlaneseq
  %v629 = vshrl.u32 %v628, 7
  %v630 = vsub.s32 %v464, %v629
  %v631 = vrot.slane %v216, %v630
  %v632 = vsel %vm469, %v631, %v627
  %v633 = vlaneseq
  %v634 = vshrl.u32 %v633, 7
  %v635 = vsub.s32 %v471, %v634
  %v636 = vrot.slane %v219, %v635
  %v637 = vsel %vm476, %v636, %v632
  %v638 = vlaneseq
  %v639 = vshrl.u32 %v638, 7
  %v640 = vsub.s32 %v478, %v639
  %v641 = vrot.slane %v222, %v640
  %v642 = vsel %vm483, %v641, %v637
  %v643 = vlaneseq
  %v644 = vshrl.u32 %v643, 7
  %v645 = vsub.s32 %v375, %v644
  %v646 = vrot.slane %v225, %v645
  %v647 = vlaneseq
  %v648 = vshrl.u32 %v647, 7
  %v649 = vsub.s32 %v380, %v648
  %v650 = vrot.slane %v228, %v649
  %v651 = vsel %vm385, %v650, %v646
  %v652 = vlaneseq
  %v653 = vshrl.u32 %v652, 7
  %v654 = vsub.s32 %v387, %v653
  %v655 = vrot.slane %v231, %v654
  %v656 = vsel %vm392, %v655, %v651
  %v657 = vlaneseq
  %v658 = vshrl.u32 %v657, 7
  %v659 = vsub.s32 %v394, %v658
  %v660 = vrot.slane %v234, %v659
  %v661 = vsel %vm399, %v660, %v656
  %v662 = vlaneseq
  %v663 = vshrl.u32 %v662, 7
  %v664 = vsub.s32 %v401, %v663
  %v665 = vrot.slane %v237, %v664
  %v666 = vsel %vm406, %v665, %v661
  %v667 = vlaneseq
  %v668 = vshrl.u32 %v667, 7
  %v669 = vsub.s32 %v408, %v668
  %v670 = vrot.slane %v240, %v669
  %v671 = vsel %vm413, %v670, %v666
  %v672 = vlaneseq
  %v673 = vshrl.u32 %v672, 7
  %v674 = vsub.s32 %v415, %v673
  %v675 = vrot.slane %v243, %v674
  %v676 = vsel %vm420, %v675, %v671
  %v677 = vlaneseq
  %v678 = vshrl.u32 %v677, 7
  %v679 = vsub.s32 %v422, %v678
  %v680 = vrot.slane %v246, %v679
  %v681 = vsel %vm427, %v680, %v676
  %v682 = vlaneseq
  %v683 = vshrl.u32 %v682, 7
  %v684 = vsub.s32 %v429, %v683
  %v685 = vrot.slane %v249, %v684
  %v686 = vsel %vm434, %v685, %v681
  %v687 = vlaneseq
  %v688 = vshrl.u32 %v687, 7
  %v689 = vsub.s32 %v436, %v688
  %v690 = vrot.slane %v252, %v689
  %v691 = vsel %vm441, %v690, %v686
  %v692 = vlaneseq
  %v693 = vshrl.u32 %v692, 7
  %v694 = vsub.s32 %v443, %v693
  %v695 = vrot.slane %v255, %v694
  %v696 = vsel %vm448, %v695, %v691
  %v697 = vlaneseq
  %v698 = vshrl.u32 %v697, 7
  %v699 = vsub.s32 %v450, %v698
  %v700 = vrot.slane %v258, %v699
  %v701 = vsel %vm455, %v700, %v696
  %v702 = vlaneseq
  %v703 = vshrl.u32 %v702, 7
  %v704 = vsub.s32 %v457, %v703
  %v705 = vrot.slane %v261, %v704
  %v706 = vsel %vm462, %v705, %v701
  %v707 = vlaneseq
  %v708 = vshrl.u32 %v707, 7
  %v709 = vsub.s32 %v464, %v708
  %v710 = vrot.slane %v264, %v709
  %v711 = vsel %vm469, %v710, %v706
  %v712 = vlaneseq
  %v713 = vshrl.u32 %v712, 7
  %v714 = vsub.s32 %v471, %v713
  %v715 = vrot.slane %v267, %v714
  %v716 = vsel %vm476, %v715, %v711
  %v717 = vlaneseq
  %v718 = vshrl.u32 %v717, 7
  %v719 = vsub.s32 %v478, %v718
  %v720 = vrot.slane %v270, %v719
  %v721 = vsel %vm483, %v720, %v716
  %vm722 = vcmask 1041409
  %v723 = vsel %vm722, %v642, %v484
  %v724 = vsel %vm722, %v721, %v563
  %727 = vmatprep.subr.mxu0 0.0
  %728 = vmatpush1.msra.mxu0 %v271
  %729 = vmatprep.subr.mxu0 0.0
  %730 = vmatpush1.msra.mxu0 %v272
  %731 = vmatprep.subr.mxu0 0.0
  %732 = vmatpush1.msra.mxu0 %v273
  %733 = vmatprep.subr.mxu0 0.0
  %734 = vmatpush1.msra.mxu0 %v274
  %735 = vmatprep.subr.mxu0 0.0
  %736 = vmatpush1.msra.mxu0 %v275
  %737 = vmatprep.subr.mxu0 0.0
  %738 = vmatpush1.msra.mxu0 %v276
  %739 = vmatprep.subr.mxu0 0.0
  %740 = vmatpush1.msra.mxu0 %v277
  %741 = vmatprep.subr.mxu0 0.0
  %742 = vmatpush1.msra.mxu0 %v278
  %743 = vmatprep.subr.mxu0 0.0
  %744 = vmatpush1.msra.mxu0 %v279
  %745 = vmatprep.subr.mxu0 0.0
  %746 = vmatpush1.msra.mxu0 %v280
  %747 = vmatprep.subr.mxu0 0.0
  %748 = vmatpush1.msra.mxu0 %v281
  %749 = vmatprep.subr.mxu0 0.0
  %750 = vmatpush1.msra.mxu0 %v282
  %751 = vmatprep.subr.mxu0 0.0
  %752 = vmatpush1.msra.mxu0 %v283
  %753 = vmatprep.subr.mxu0 0.0
  %754 = vmatpush1.msra.mxu0 %v284
  %755 = vmatprep.subr.mxu0 0.0
  %756 = vmatpush1.msra.mxu0 %v285
  %757 = vmatprep.subr.mxu0 0.0
  %758 = vmatpush1.msra.mxu0 %v286
  %759 = vmatprep.subr.mxu0 0.0
  %760 = vmatpush1.msra.mxu0 %v287
  %761 = vmatprep.subr.mxu0 0.0
  %762 = vmatpush1.msra.mxu0 %v288
  %763 = vmatprep.subr.mxu0 0.0
  %764 = vmatpush1.msra.mxu0 %v289
  %765 = vmatprep.subr.mxu0 0.0
  %766 = vmatpush1.msra.mxu0 %v290
  %767 = vmatprep.subr.mxu0 0.0
  %768 = vmatpush1.msra.mxu0 %v291
  %769 = vmatprep.subr.mxu0 0.0
  %770 = vmatpush1.msra.mxu0 %v292
  %771 = vmatprep.subr.mxu0 0.0
  %772 = vmatpush1.msra.mxu0 %v293
  %773 = vmatprep.subr.mxu0 0.0
  %774 = vmatpush1.msra.mxu0 %v294
  %775 = vmatprep.subr.mxu0 0.0
  %776 = vmatpush1.msra.mxu0 %v295
  %777 = vmatprep.subr.mxu0 0.0
  %778 = vmatpush1.msra.mxu0 %v296
  %779 = vmatprep.subr.mxu0 0.0
  %780 = vmatpush1.msra.mxu0 %v297
  %781 = vmatprep.subr.mxu0 0.0
  %782 = vmatpush1.msra.mxu0 %v298
  %783 = vmatprep.subr.mxu0 0.0
  %784 = vmatpush1.msra.mxu0 %v299
  %785 = vmatprep.subr.mxu0 0.0
  %786 = vmatpush1.msra.mxu0 %v300
  %787 = vmatprep.subr.mxu0 0.0
  %788 = vmatpush1.msra.mxu0 %v301
  %789 = vmatprep.subr.mxu0 0.0
  %790 = vmatpush1.msra.mxu0 %v302
  %791 = vmatprep.mubr.f32.mxu0 %v724
  %792 = vmatmul.mubr.f32.gmra.mrb[0].mxu0 %v723
  %v793 = vpop.f32.mrb[0].mxu0
  %v794 = vadd.f32 %v308, %v793
  %v795 = vpop.f32.mrb[0].mxu0
  %796 = vdwg.mxu0
  %797 = vst [vmem:[%s3] sm:$0x3] %v794
  // Predicated region
  $region14: #{rroi_learner_forward.1} parent=0 // pred_check
    _
  $region15: #{rroi_learner_forward.1} parent=0 // pred_check_branch
    %799 = sbr.rel (0) target = $region17
  $region16: #{rroi_learner_forward.1} parent=0 // pred_region
    _
  $region17: #{rroi_learner_forward.1} parent=0 // pred_fallthru
    _
  // Predicated region
  $region18: #{rroi_learner_forward.1} parent=0 // pred_check
    _
  $region19: #{rroi_learner_forward.1} parent=0 // pred_check_branch
    %801 = sbr.rel (0) target = $region21
  $region20: #{rroi_learner_forward.1} parent=0 // pred_region
    _
  $region21: #{rroi_learner_forward.1} parent=0 // pred_fallthru
    _

</llo_original>
